<compile_context>
chip_gen: v7x
topology: tpu7x:2x2x1
jax: 0.10.0
libtpu: 0.0.40
codegen_flags: <defaults>
</compile_context>

<pallas_src>
import jax
import jax.numpy as jnp
from jax.experimental import pallas as pl
from jax.experimental.pallas import tpu as pltpu


def _silu(v):
    return v * jax.nn.sigmoid(v)


def add_time_silu_kernel(temb_ref, x_ref, o_ref):
    # temb_ref: (TR, 1)  f32 per-(b*c)-row time-MLP output (lane broadcast)
    # x_ref:    (TR, TL) feature-map tile (rows = B*C sublanes, lanes = H*W)
    # o_ref:    (TR, TL)
    # Compute in f32 regardless of stored dtype; cast only on the store.
    y = x_ref[...].astype(jnp.float32) + temb_ref[...]
    o_ref[...] = (y * jax.nn.sigmoid(y)).astype(o_ref.dtype)


def _round_up(n, m):
    return ((n + m - 1) // m) * m


def time_mlp_forward(x, t, w1, b1, w2, b2):
    """x: (B, C, H, W) NCHW; t: (B, E). Returns silu(x + mlp(t)[:, :, None, None])."""
    B, C, H, W = x.shape
    HW = H * W
    R = B * C

    # --- time MLP hoisted to XLA: one (B,E)x(E,Hd) and one (B,Hd)x(Hd,C) matmul
    # for the whole batch instead of B separate M=1 MXU pushes per grid step.
    h = _silu(jnp.dot(t, w1, preferred_element_type=jnp.float32) + b1)
    temb = jnp.dot(h, w2, preferred_element_type=jnp.float32) + b2       # (B, C) f32
    temb_col = temb.reshape(R, 1)            # keep f32; add+SiLU computed in f32

    # --- lane/sublane-dense layout for the mem-bound fused add+SiLU.
    x2 = x.reshape(R, HW)
    itemsize = x.dtype.itemsize

    # Fixed, dtype-aware tiles + cdiv grid; Pallas masks the edge blocks.
    # Sublane packing: 8 rows for 32-bit, 16 for bf16, 32 for 8-bit dtypes.
    row_align = 8 * max(1, 4 // itemsize)
    tr = min(512, _round_up(R, row_align))
    tl = min(2048, _round_up(HW, 128))

    # Only when the entire problem fits in one block, split the lane axis once
    # so a second TensorCore (v7x) has work; single extra step elsewhere is
    # ~0.35us, negligible.
    if pl.cdiv(R, tr) * pl.cdiv(HW, tl) == 1 and tl >= 256:
        tl //= 2

    grid = (pl.cdiv(R, tr), pl.cdiv(HW, tl))

    cost = pl.CostEstimate(
        flops=5 * R * HW,                                   # add + silu (mul, sigmoid-ish)
        transcendentals=R * HW,                             # one exp per element
        bytes_accessed=2 * R * HW * itemsize + R * 4,       # x in + out + temb column
    )

    out2 = pl.pallas_call(
        add_time_silu_kernel,
        out_shape=jax.ShapeDtypeStruct((R, HW), x.dtype),
        grid=grid,
        in_specs=[
            # temb column: j is the innermost grid axis, so this tiny
            # (tr x lane-padded) tile is re-DMA'd only when i changes, and its
            # VMEM footprint is bounded for any R.
            pl.BlockSpec((tr, 1), lambda i, j: (i, 0)),
            pl.BlockSpec((tr, tl), lambda i, j: (i, j)),    # x tile
        ],
        out_specs=pl.BlockSpec((tr, tl), lambda i, j: (i, j)),
        compiler_params=pltpu.CompilerParams(
            dimension_semantics=("parallel", "parallel"),
            # 512x2048 f32 tiles double-buffered are ~16.5 MiB: above v5e's
            # 16 MiB scoped default, comfortably under v7x's 64 MiB physical.
            vmem_limit_bytes=48 << 20,
        ),
        cost_estimate=cost,
    )(temb_col, x2)

    return out2.reshape(B, C, H, W)


def reference_forward(x, t, w1, b1, w2, b2):
    h = _silu(t @ w1 + b1)
    temb = h @ w2 + b2
    y = x + temb[:, :, None, None]
    return _silu(y)


if __name__ == "__main__":
    # Small shapes consistent with the module:
    #   embedding_dim=8, hidden_dim=32, out_dim=C=4, batch=2, spatial=16x16
    B, C, H, W = 2, 4, 16, 16
    E, Hd = 8, 32

    key = jax.random.PRNGKey(0)
    kx, kt, kw1, kb1, kw2, kb2 = jax.random.split(key, 6)

    x = jax.random.normal(kx, (B, C, H, W), dtype=jnp.float32)
    t = jax.random.normal(kt, (B, E), dtype=jnp.float32)
    # Linear weights stored as (in, out); biases as (out,).
    w1 = jax.random.normal(kw1, (E, Hd), dtype=jnp.float32) * 0.1
    b1 = jax.random.normal(kb1, (Hd,), dtype=jnp.float32) * 0.1
    w2 = jax.random.normal(kw2, (Hd, C), dtype=jnp.float32) * 0.1
    b2 = jax.random.normal(kb2, (C,), dtype=jnp.float32) * 0.1

    out = time_mlp_forward(x, t, w1, b1, w2, b2)
    jax.block_until_ready(out)

    ref = reference_forward(x, t, w1, b1, w2, b2)
    assert out.shape == (B, C, H, W)
    assert jnp.allclose(out, ref, atol=1e-5, rtol=1e-5)

    print("KERNEL_OK")
</pallas_src>

<mosaic_0001>
module attributes {stable_mosaic.version = 11 : i64} {
  func.func @add_time_silu_kernel(%arg0: i32, %arg1: i32, %arg2: memref<8x1xf32, #tpu.memory_space<vmem>>, %arg3: memref<8x128xf32, #tpu.memory_space<vmem>>, %arg4: memref<8x128xf32, #tpu.memory_space<vmem>>) attributes {dimension_semantics = [#tpu.dimension_semantics<parallel>, #tpu.dimension_semantics<parallel>], iteration_bounds = array<i64: 1, 2>, scalar_prefetch = 0 : i64, scratch_operands = 0 : i64, tpu.core_type = #tpu.core_type<tc>, window_params = [{transform_indices = @transform_0, window_bounds = array<i64: 8, 1>}, {transform_indices = @transform_1, window_bounds = array<i64: 8, 128>}, {transform_indices = @transform_2, window_bounds = array<i64: 8, 128>}]} {
    %c0 = arith.constant 0 : index
    %c0_0 = arith.constant 0 : index
    %0 = vector.load %arg3[%c0, %c0_0] : memref<8x128xf32, #tpu.memory_space<vmem>>, vector<8x128xf32>
    %c0_1 = arith.constant 0 : index
    %c0_2 = arith.constant 0 : index
    %1 = vector.load %arg2[%c0_1, %c0_2] : memref<8x1xf32, #tpu.memory_space<vmem>>, vector<8x1xf32>
    %2 = vector.broadcast %1 : vector<8x1xf32> to vector<8x128xf32>
    %3 = arith.addf %0, %2 : vector<8x128xf32>
    %4 = arith.negf %3 : vector<8x128xf32>
    %5 = math.exp %4 : vector<8x128xf32>
    %cst = arith.constant 1.000000e+00 : f32
    %6 = vector.broadcast %cst : f32 to vector<8x128xf32>
    %7 = arith.addf %6, %5 : vector<8x128xf32>
    %8 = arith.divf %6, %7 : vector<8x128xf32>
    %9 = arith.mulf %3, %8 : vector<8x128xf32>
    %c0_3 = arith.constant 0 : index
    %c0_4 = arith.constant 0 : index
    %10 = vector.load %arg4[%c0_3, %c0_4] : memref<8x128xf32, #tpu.memory_space<vmem>>, vector<8x128xf32>
    tpu.vector_store %arg4[%c0_3, %c0_4], %9 {strides = array<i32>} : memref<8x128xf32, #tpu.memory_space<vmem>>, vector<8x128xf32>,
    return
  }
  func.func @transform_0(%arg0: i32, %arg1: i32) -> (i32, i32) {
    %c0_i32 = arith.constant 0 : i32
    %c0_i32_0 = arith.constant 0 : i32
    return %arg0, %c0_i32 : i32, i32
  }
  func.func @transform_1(%arg0: i32, %arg1: i32) -> (i32, i32) {
    %c0_i32 = arith.constant 0 : i32
    return %arg0, %arg1 : i32, i32
  }
  func.func @transform_2(%arg0: i32, %arg1: i32) -> (i32, i32) {
    %c0_i32 = arith.constant 0 : i32
    return %arg0, %arg1 : i32, i32
  }
}

</mosaic_0001>

<llo_original>
// kernel: tpu_custom_call.1
$region0: #{tpu_custom_call.1}
  #allocation0 [shape = 'u32[]', space=smem, size = 0x4, offset = 0x4, fixed_abs, tag = 'smem constant byte address 0x4 - core index']
  #allocation1 [shape = 'u32[144,128]{1,0:T(1,128)}', space=vmem, size = 0x12000, scoped, tag = 'internal scratch']
  %s0 = inlined_call_operand.vmem [shape: f32[8,1], index: 0, kind: input, shape index: {}]
  %s1 = inlined_call_operand.hbm [shape: f32[8,256], index: 1, kind: input, shape index: {}]
  %s2 = inlined_call_operand.hbm [shape: f32[8,256], index: 2, kind: output, shape index: {}]
  %s3 = sld [smem:[#allocation0]]
  $region45: #{tpu_custom_call.1} parent=0
    _
  %s5 = ssub.s32 1, %s3
  %s6 = scalar_select 0, %s5, %s3
  $region1: #{tpu_custom_call.1} parent=0
    #allocation2 [shape = 'u8[8192]{0}', space=vmem, size = 0x2000, scoped, tag = 'input window, operand 1']
    #allocation3 [shape = 's32[2]{0}', space=sflag, size = 0x8, scoped, tag = 'scoped memory for tpu_custom_call.1']
    #allocation4 [shape = 's32[2]{0}', space=sflag, size = 0x8, scoped, tag = 'scoped memory for tpu_custom_call.1']
    #allocation5 [shape = 'u8[8192]{0}', space=vmem, size = 0x2000, scoped, tag = 'output window, operand 0']
    %7 = vsyncpa [#allocation3], 0
    %s8 = scalar_lea.sflag [#allocation3], 1
    %9 = vsyncpa %s8, 0
    %10 = vsyncpa [#allocation4], 0
    %s11 = scalar_lea.sflag [#allocation4], 1
    %12 = vsyncpa %s11, 0
    loop: start=0, step=1, limit=4
    $region2: #{tpu_custom_call.1} parent=1 // loop_pre_header
      _
    $region3: #{tpu_custom_call.1} parent=1 // loop_header
      %s14 = sphi 0, %s18
      %p15 = scmp.ge.s32.totalorder %s14, 4
      %s21 = sphi 0, %s33
      %s22 = sphi 0, %s29
      %s23 = sphi 0, %s21
      %s24 = sphi 0, %s22
      %s25 = sphi 0, %s23
      %s26 = sphi 0, %s24
      %s36 = sphi 0, %s38
      %s39 = sphi 0, %s36
      %s40 = sphi 0, %s39
      %s56 = sphi 0, %s40
      %s64 = sphi 0, %s66
      %s67 = sphi 0, %s64
      %s68 = sphi 0, %s67
      %s84 = sphi 0, %s68
      %s92 = sphi 0, %s94
      %s95 = sphi 0, %s92
      %s96 = sphi 0, %s95
      %s112 = sphi 0, %s96
    $region4: #{tpu_custom_call.1} parent=1 // loop_header_branch
      %17 = sbr.rel (%p15) target = $region8
    $region5: #{tpu_custom_call.1} parent=1 // loop_body
      %s19 = ssub.s32 %s14, 1
      %s20 = ssub.s32 %s14, 2
      %s27 = sadd.s32 1, %s22
      %p28 = scmp.ge.s32.totalorder %s27, 2
      %s29 = scalar_select %p28, 0, %s27
      %s30 = sadd.s32 1, %s21
      %s31 = scalar_select %p28, %s30, %s21
      %p32 = scmp.ge.s32.totalorder %s31, 1
      %s33 = scalar_select %p32, 0, %s31
      %s34 = ssub.s32 %s21, %s33
      %p35 = scmp.eq.s32.totalorder %s34, 0
      %s37 = sadd.s32 %s36, 1
      %s38 = scalar_select %p35, %s36, %s37
      %p41 = pneg %p35
      %p42 = scmp.eq.s32.totalorder %s14, 1
      %p43 = por %p41, %p42
      %p44 = scmp.ne.s32.totalorder %s36, %s39
      %p45 = scmp.eq.s32.totalorder %s14, 0
      %p46 = por %p44, %p45
      %p47 = scmp.ne.s32.totalorder %s36, %s39
      %p48 = scmp.eq.s32.totalorder %s19, 1
      %p49 = por %p47, %p48
      %p50 = scmp.ne.s32.totalorder %s39, %s40
      %p51 = scmp.eq.s32.totalorder %s19, 0
      %p52 = por %p50, %p51
      %p53 = scmp.ne.s32.totalorder %s39, %s40
      %p54 = scmp.eq.s32.totalorder %s20, 1
      %p55 = por %p53, %p54
      %p57 = scmp.ne.s32.totalorder %s40, %s56
      %p58 = scmp.eq.s32.totalorder %s20, 0
      %p59 = por %p57, %p58
      %s60 = ssub.s32 %s21, %s33
      %s61 = ssub.s32 %s22, %s29
      %s62 = sor.u32 %s60, %s61
      %p63 = scmp.eq.s32.totalorder %s62, 0
      %s65 = sadd.s32 %s64, 1
      %s66 = scalar_select %p63, %s64, %s65
      %p69 = pneg %p63
      %p70 = scmp.eq.s32.totalorder %s14, 1
      %p71 = por %p69, %p70
      %p72 = scmp.ne.s32.totalorder %s64, %s67
      %p73 = scmp.eq.s32.totalorder %s14, 0
      %p74 = por %p72, %p73
      %p75 = scmp.ne.s32.totalorder %s64, %s67
      %p76 = scmp.eq.s32.totalorder %s19, 1
      %p77 = por %p75, %p76
      %p78 = scmp.ne.s32.totalorder %s67, %s68
      %p79 = scmp.eq.s32.totalorder %s19, 0
      %p80 = por %p78, %p79
      %p81 = scmp.ne.s32.totalorder %s67, %s68
      %p82 = scmp.eq.s32.totalorder %s20, 1
      %p83 = por %p81, %p82
      %p85 = scmp.ne.s32.totalorder %s68, %s84
      %p86 = scmp.eq.s32.totalorder %s20, 0
      %p87 = por %p85, %p86
      %s88 = ssub.s32 %s21, %s33
      %s89 = ssub.s32 %s22, %s29
      %s90 = sor.u32 %s88, %s89
      %p91 = scmp.eq.s32.totalorder %s90, 0
      %s93 = sadd.s32 %s92, 1
      %s94 = scalar_select %p91, %s92, %s93
      %p97 = pneg %p91
      %p98 = scmp.eq.s32.totalorder %s14, 1
      %p99 = por %p97, %p98
      %p100 = scmp.ne.s32.totalorder %s92, %s95
      %p101 = scmp.eq.s32.totalorder %s14, 0
      %p102 = por %p100, %p101
      %p103 = scmp.ne.s32.totalorder %s92, %s95
      %p104 = scmp.eq.s32.totalorder %s19, 1
      %p105 = por %p103, %p104
      %p106 = scmp.ne.s32.totalorder %s95, %s96
      %p107 = scmp.eq.s32.totalorder %s19, 0
      %p108 = por %p106, %p107
      %p109 = scmp.ne.s32.totalorder %s95, %s96
      %p110 = scmp.eq.s32.totalorder %s20, 1
      %p111 = por %p109, %p110
      %p113 = scmp.ne.s32.totalorder %s96, %s112
      %p114 = scmp.eq.s32.totalorder %s20, 0
      %p115 = por %p113, %p114
      %p116 = scmp.le.s32.totalorder 1, %s14
      %p117 = scmp.lt.s32.totalorder %s14, 3
      %p118 = pnand %p116, %p117
      %p119 = pneg %p118
      // Predicated region
      $region9: #{tpu_custom_call.1} parent=5 // pred_check
        _
      $region10: #{tpu_custom_call.1} parent=5 // pred_check_branch
        %121 = sbr.rel (%p118) target = $region12
      $region11: #{tpu_custom_call.1} parent=5 // pred_region
        %s122 = ssub.s32 %s14, 1
        // Predicated region
        $region13: #{tpu_custom_call.1} parent=11 // pred_check
          %p123 = pneg %p52
        $region14: #{tpu_custom_call.1} parent=11 // pred_check_branch
          %125 = sbr.rel (%p123) target = $region16
        $region15: #{tpu_custom_call.1} parent=11 // pred_region
          %p126 = scmp.lt.s32.totalorder %s23, 0
          %s127 = scalar_select %p126, %s23, 0
          %s128 = smul.addr %s127, 8
          %s129 = scalar_lea.vmem %s0, %s128
        $region16: #{tpu_custom_call.1} parent=11 // pred_fallthru
          _
      $region12: #{tpu_custom_call.1} parent=5 // pred_fallthru
        _
      %p130 = scmp.lt.s32.totalorder %s14, 2
      // Predicated region
      $region17: #{tpu_custom_call.1} parent=5 // pred_check
        %p131 = pneg %p130
      $region18: #{tpu_custom_call.1} parent=5 // pred_check_branch
        %133 = sbr.rel (%p131) target = $region20
      $region19: #{tpu_custom_call.1} parent=5 // pred_region
        // Predicated region
        $region21: #{tpu_custom_call.1} parent=19 // pred_check
          %p134 = pneg %p74
        $region22: #{tpu_custom_call.1} parent=19 // pred_check_branch
          %136 = sbr.rel (%p134) target = $region24
        $region23: #{tpu_custom_call.1} parent=19 // pred_region
          %s137 = sand.u32 %s64, 1
          %s138 = scalar_lea.sflag [#allocation3], %s137
          %s139 = sand.u32 %s64, 1
          %s140 = smul.addr %s139, 8
          %s141 = scalar_lea.vmem [#allocation2], %s140
          %s143 = ssub.s32 128, 128
          %144 = vsyncadd %s138, %s143
          %s145 = smul.addr %s21, 2
          %s146 = sadd.s32 %s22, %s145
          %s147 = smul.addr %s146, 128
          %s148 = scalar_lea.hbm %s1, %s147
          %s150 = sshll.u32 %s141, 4
          %s151 = int_to_ptr.vmem [resolvable:$true] %s150
          %153 = dma.hbm_to_vmem [thread:$0]  %s148, 128, %s151, %s138
        $region24: #{tpu_custom_call.1} parent=19 // pred_fallthru
          _
      $region20: #{tpu_custom_call.1} parent=5 // pred_fallthru
        _
      %p154 = scmp.le.s32.totalorder 1, %s14
      %p155 = scmp.lt.s32.totalorder %s14, 3
      %p156 = pnand %p154, %p155
      %p157 = pneg %p156
      // Predicated region
      $region25: #{tpu_custom_call.1} parent=5 // pred_check
        _
      $region26: #{tpu_custom_call.1} parent=5 // pred_check_branch
        %159 = sbr.rel (%p156) target = $region28
      $region27: #{tpu_custom_call.1} parent=5 // pred_region
        %s160 = ssub.s32 %s14, 1
        %s161 = sand.u32 %s67, 1
        %s162 = scalar_lea.sflag [#allocation3], %s161
        %s163 = sand.u32 %s67, 1
        %s164 = smul.addr %s163, 8
        %s165 = scalar_lea.vmem [#allocation2], %s164
        // Predicated region
        $region29: #{tpu_custom_call.1} parent=27 // pred_check
          %p166 = pneg %p80
        $region30: #{tpu_custom_call.1} parent=27 // pred_check_branch
          %168 = sbr.rel (%p166) target = $region32
        $region31: #{tpu_custom_call.1} parent=27 // pred_region
          %169 = dma.done %s162, 128
        $region32: #{tpu_custom_call.1} parent=27 // pred_fallthru
          _
        %p170 = scmp.lt.s32.totalorder %s23, 0
        %s171 = scalar_select %p170, %s23, 0
        %s172 = smul.addr %s171, 8
        %s173 = scalar_lea.vmem %s0, %s172
        %p174 = pneg %p52
        %p175 = pneg %p49
        %s176 = sand.u32 %s67, 1
        %s177 = scalar_lea.sflag [#allocation3], %s176
        %s178 = sand.u32 %s67, 1
        %s179 = smul.addr %s178, 8
        %s180 = scalar_lea.vmem [#allocation2], %s179
        %p181 = pneg %p80
        %p182 = pneg %p77
        %p183 = pneg %p108
        %p184 = pneg %p105
        %s185 = sand.u32 %s95, 1
        %s186 = scalar_lea.sflag [#allocation4], %s185
        %s187 = sand.u32 %s95, 1
        %s188 = smul.addr %s187, 8
        %s189 = scalar_lea.vmem [#allocation5], %s188
        %p190 = scmp.lt.s32.totalorder %s23, 0
        %s191 = scalar_select %p190, %s23, 0
        %s192 = smul.addr %s191, 8
        %s193 = scalar_lea.vmem %s0, %s192
        %v194 = vld [vmem:[%s165] sm:$0xff]
        %v195 = vld [vmem:[%s193] sm:$0xff]
        %197 = vset.pattern.permute.xlu0 0
        %198 = vperm.xlu0 %197, %v195
        %v199 = vpop.permute.xlu0 %198
        %v201 = vadd.f32 %v194, %v199
        %v202 = vxor.u32 %v201, 2147483648
        %v203 = vmul.f32 %v202, 1.442695
        %v204 = vpow.pop %v203
        %v205 = vadd.f32 %v204, 1.0
        %v206 = vrcp.pop %v205
        %v207 = vmul.f32 1.0, %v206
        %v208 = vmul.f32 %v201, %v207
        %209 = vst [vmem:[%s189] sm:$0xff] %v208
        %s210 = sand.u32 %s95, 1
        %s211 = scalar_lea.sflag [#allocation4], %s210
        %s212 = sand.u32 %s95, 1
        %s213 = smul.addr %s212, 8
        %s214 = scalar_lea.vmem [#allocation5], %s213
        // Predicated region
        $region33: #{tpu_custom_call.1} parent=27 // pred_check
          %p215 = pneg %p105
        $region34: #{tpu_custom_call.1} parent=27 // pred_check_branch
          %217 = sbr.rel (%p215) target = $region36
        $region35: #{tpu_custom_call.1} parent=27 // pred_region
          %s219 = ssub.s32 128, 128
          %220 = vsyncadd %s211, %s219
          %s221 = smul.addr %s23, 2
          %s222 = sadd.s32 %s24, %s221
          %s223 = smul.addr %s222, 128
          %s224 = scalar_lea.hbm %s2, %s223
          %s226 = sshll.u32 %s214, 4
          %s227 = int_to_ptr.vmem [resolvable:$true] %s226
          %229 = dma.vmem_to_hbm [thread:$0]  %s227, 128, %s224, %s211
        $region36: #{tpu_custom_call.1} parent=27 // pred_fallthru
          _
      $region28: #{tpu_custom_call.1} parent=5 // pred_fallthru
        _
      %p230 = scmp.le.s32.totalorder 2, %s14
      // Predicated region
      $region37: #{tpu_custom_call.1} parent=5 // pred_check
        %p231 = pneg %p230
      $region38: #{tpu_custom_call.1} parent=5 // pred_check_branch
        %233 = sbr.rel (%p231) target = $region40
      $region39: #{tpu_custom_call.1} parent=5 // pred_region
        %s234 = ssub.s32 %s14, 2
        // Predicated region
        $region41: #{tpu_custom_call.1} parent=39 // pred_check
          %p235 = pneg %p111
        $region42: #{tpu_custom_call.1} parent=39 // pred_check_branch
          %237 = sbr.rel (%p235) target = $region44
        $region43: #{tpu_custom_call.1} parent=39 // pred_region
          %s238 = sand.u32 %s96, 1
          %s239 = scalar_lea.sflag [#allocation4], %s238
          %s240 = sand.u32 %s96, 1
          %s241 = smul.addr %s240, 8
          %s242 = scalar_lea.vmem [#allocation5], %s241
          %243 = dma.done %s239, 128
        $region44: #{tpu_custom_call.1} parent=39 // pred_fallthru
          _
      $region40: #{tpu_custom_call.1} parent=5 // pred_fallthru
        _
    $region6: #{tpu_custom_call.1} parent=1 // loop_footer
      %s18 = sadd.s32 1, %s14
    $region7: #{tpu_custom_call.1} parent=1 // loop_footer_branch
      %13 = sbr.rel target = $region3
    $region8: #{tpu_custom_call.1} parent=1 // loop_exit
      _
    %244 = vsyncpa [#allocation3], 1
    %s245 = scalar_lea.sflag [#allocation3], 1
    %246 = vsyncpa %s245, 1
    %247 = vsyncpa [#allocation4], 1
    %s248 = scalar_lea.sflag [#allocation4], 1
    %249 = vsyncpa %s248, 1

</llo_original>
